<compile_context>
chip_gen: v7x
topology: tpu7x:2x2x1
jax: 0.10.0
libtpu: 0.0.40
codegen_flags: <defaults>
</compile_context>

<pallas_src>
import functools

import jax
import jax.numpy as jnp
import numpy as np
from jax.experimental import pallas as pl
from jax.experimental.pallas import tpu as pltpu

LANE = 128


def _round_up(n, m):
    return ((n + m - 1) // m) * m


# --------------------------------------------------------------------------
# Kernel: one SAGE layer, tiled over (Nt tiles, Ns reduction tiles).
# --------------------------------------------------------------------------
def _sage_layer_kernel(a_ref, hsrc_ref, deginv_ref, xtgt_ref, wl_ref, wr_ref,
                       b_ref, o_ref, acc_ref, *, apply_relu):
    """Refs per grid step:
      a_ref      [tm, tk]        bf16 neighbor-count tile (un-normalized)
      hsrc_ref   [tk, Cin_pad]   bf16 source features tile
      deginv_ref [tm, 1]         f32  1 / max(deg, 1)
      xtgt_ref   [tm, Cin_pad]   bf16 target (root) features
      wl_ref     [Cin_pad, Cout_pad] bf16 W_l^T
      wr_ref     [Cin_pad, Cout_pad] bf16 W_r^T
      b_ref      [1, Cout_pad]   f32 bias
      o_ref      [tm, Cout_pad]  output tile (resident across the Ns axis)
      acc_ref    [tm, Cin_pad]   f32 VMEM accumulator for sum_j x_j
    """
    k = pl.program_id(1)

    @pl.when(k == 0)
    def _():
        acc_ref[...] = jnp.zeros_like(acc_ref)

    # Neighbor-sum partial: bf16 operands, f32 accumulation on the MXU.
    acc_ref[...] += jnp.dot(a_ref[...], hsrc_ref[...],
                            preferred_element_type=jnp.float32)

    @pl.when(k == pl.num_programs(1) - 1)
    def _():
        # Mean aggregation (exact 1/deg, padded/isolated rows have acc == 0).
        agg = (acc_ref[...] * deginv_ref[...]).astype(jnp.bfloat16)
        # SAGEConv projection: two dots sharing the f32 result (no concat copy).
        out = jnp.dot(agg, wl_ref[...], preferred_element_type=jnp.float32)
        out = out + jnp.dot(xtgt_ref[...], wr_ref[...],
                            preferred_element_type=jnp.float32)
        out = out + b_ref[...]
        if apply_relu:
            # TODO(synk): F.dropout(p=0.5, training=True) omitted — eval mode.
            out = jnp.maximum(out, 0.0)
        o_ref[...] = out.astype(o_ref.dtype)


def _sage_layer(a, deg_inv, h_src, x_tgt, wl, wr, b, *, apply_relu, out_dtype,
                tm=128, tk=512):
    nt_pad, ns_pad = a.shape
    cin_pad = h_src.shape[1]
    cout_pad = wl.shape[1]

    tm = min(tm, nt_pad)              # nt_pad is a multiple of 128
    tk = min(tk, ns_pad)              # ns_pad is a multiple of 128
    while ns_pad % tk:
        tk -= LANE
    grid = (nt_pad // tm, ns_pad // tk)

    flops = 2 * nt_pad * ns_pad * cin_pad + 4 * nt_pad * cin_pad * cout_pad
    bytes_accessed = (a.size * 2 + h_src.size * 2 + x_tgt.size * 2
                      + deg_inv.size * 4 + (wl.size + wr.size) * 2
                      + b.size * 4
                      + nt_pad * cout_pad * jnp.dtype(out_dtype).itemsize)

    kernel = functools.partial(_sage_layer_kernel, apply_relu=apply_relu)
    return pl.pallas_call(
        kernel,
        out_shape=jax.ShapeDtypeStruct((nt_pad, cout_pad), out_dtype),
        grid_spec=pltpu.PrefetchScalarGridSpec(
            num_scalar_prefetch=0,
            grid=grid,
            in_specs=[
                pl.BlockSpec((tm, tk), lambda i, k: (i, k)),             # A
                pl.BlockSpec((tk, cin_pad), lambda i, k: (k, 0)),        # h_src
                pl.BlockSpec((tm, 1), lambda i, k: (i, 0)),              # 1/deg
                pl.BlockSpec((tm, cin_pad), lambda i, k: (i, 0)),        # x_tgt
                pl.BlockSpec((cin_pad, cout_pad), lambda i, k: (0, 0)),  # W_l
                pl.BlockSpec((cin_pad, cout_pad), lambda i, k: (0, 0)),  # W_r
                pl.BlockSpec((1, cout_pad), lambda i, k: (0, 0)),        # bias
            ],
            out_specs=pl.BlockSpec((tm, cout_pad), lambda i, k: (i, 0)),
            scratch_shapes=[pltpu.VMEM((tm, cin_pad), jnp.float32)],
        ),
        compiler_params=pltpu.CompilerParams(
            dimension_semantics=("parallel", "arbitrary"),
            vmem_limit_bytes=48 * 1024 * 1024,   # fits v7x's 64 MiB comfortably
        ),
        cost_estimate=pl.CostEstimate(flops=flops, transcendentals=0,
                                      bytes_accessed=bytes_accessed),
    )(a, h_src, deg_inv, x_tgt, wl, wr, b)


# --------------------------------------------------------------------------
# Wrapper-side packing (hoisted out of the forward path).
# --------------------------------------------------------------------------
def pack_sage_params(params):
    """Pad to (128, 128) multiples and cast MXU operands to bf16 — once."""
    packed = []
    for w_l, w_r, b in params:
        c_in, c_out = w_l.shape
        cin_pad, cout_pad = _round_up(c_in, LANE), _round_up(c_out, LANE)
        wl = jnp.zeros((cin_pad, cout_pad), jnp.float32)
        wl = wl.at[:c_in, :c_out].set(w_l).astype(jnp.bfloat16)
        wr = jnp.zeros((cin_pad, cout_pad), jnp.float32)
        wr = wr.at[:c_in, :c_out].set(w_r).astype(jnp.bfloat16)
        bp = jnp.zeros((1, cout_pad), jnp.float32).at[:, :c_out].set(b)
        packed.append((wl, wr, bp))
    return packed


def build_dense_adjs(adjs):
    """Dense neighbor-count adjacency + exact 1/deg per layer (node dims padded
    to multiples of 128 so A is lane-dense and the MXU K is full)."""
    # TODO(synk): for non-toy sampled subgraphs replace this O(Nt*Ns) dense
    # scatter with an edge-list gather-accumulate kernel (PrefetchScalarGridSpec).
    dense = []
    for edge_index, _, (n_src, n_tgt) in adjs:
        ns_pad = _round_up(n_src, LANE)
        nt_pad = _round_up(n_tgt, LANE)
        src, tgt = edge_index[0], edge_index[1]
        a = jnp.zeros((nt_pad, ns_pad), jnp.float32).at[tgt, src].add(1.0)
        deg_inv = 1.0 / jnp.maximum(a.sum(axis=1, keepdims=True), 1.0)
        dense.append((a.astype(jnp.bfloat16), deg_inv, (n_src, n_tgt)))
    return dense


def sage_forward(x, dense_adjs, packed_params, out_channels):
    """Runs the SAGE forward using one tiled Pallas call per layer."""
    num_layers = len(packed_params)
    n0, c0 = x.shape
    ns_pad = _round_up(n0, LANE)
    cin_pad = _round_up(c0, LANE)
    h = jnp.zeros((ns_pad, cin_pad), jnp.bfloat16)
    h = h.at[:n0, :c0].set(x.astype(jnp.bfloat16))

    prev_tgt = n0
    for i, ((a, deg_inv, (n_src, n_tgt)), (wl, wr, bp)) in enumerate(
            zip(dense_adjs, packed_params)):
        assert n_src == prev_tgt, "adjs must chain: size[0] == previous size[1]"
        assert a.shape[1] == h.shape[0], "padded source dim mismatch"
        last = (i == num_layers - 1)
        nt_pad = a.shape[0]
        x_tgt = h[:nt_pad]  # padded rows beyond n_tgt never reach valid output
        h = _sage_layer(a, deg_inv, h, x_tgt, wl, wr, bp,
                        apply_relu=not last,
                        out_dtype=jnp.float32 if last else jnp.bfloat16)
        prev_tgt = n_tgt

    return h[:prev_tgt, :out_channels]


# --------------------------------------------------------------------------
# Pure-JAX f32 reference (matches the PyTorch module in eval mode).
# --------------------------------------------------------------------------
def sage_forward_ref(x, adjs, params):
    num_layers = len(params)
    for i, ((edge_index, _, (n_src, n_tgt)), (w_l, w_r, b)) in enumerate(
            zip(adjs, params)):
        src, tgt = edge_index[0], edge_index[1]
        a = jnp.zeros((n_tgt, n_src), jnp.float32).at[tgt, src].add(1.0)
        a_mean = a / jnp.maximum(a.sum(axis=1, keepdims=True), 1.0)
        x_target = x[:n_tgt]
        x = a_mean @ x @ w_l + x_target @ w_r + b
        if i != num_layers - 1:
            x = jnp.maximum(x, 0.0)
    return x


def init_sage_params(key, in_channels, hidden_channels, out_channels,
                     num_layers):
    """Per layer: (W_l^T [Cin,Cout], W_r^T [Cin,Cout], b [1,Cout])."""
    params = []
    for i in range(num_layers):
        c_in = in_channels if i == 0 else hidden_channels
        c_out = out_channels if i == num_layers - 1 else hidden_channels
        key, k1, k2, k3 = jax.random.split(key, 4)
        bound = 1.0 / jnp.sqrt(jnp.float32(c_in))
        w_l = jax.random.uniform(k1, (c_in, c_out), jnp.float32, -bound, bound)
        w_r = jax.random.uniform(k2, (c_in, c_out), jnp.float32, -bound, bound)
        b = jax.random.uniform(k3, (1, c_out), jnp.float32, -bound, bound)
        params.append((w_l, w_r, b))
    return params


if __name__ == "__main__":
    key = jax.random.PRNGKey(0)

    in_channels, hidden_channels, out_channels, num_layers = 32, 32, 16, 2
    n0_src, n0_tgt = 64, 32        # layer-0 bipartite graph
    n1_src, n1_tgt = n0_tgt, 16    # layer-1 bipartite graph
    n_edges0, n_edges1 = 128, 64

    key, kx, ke0s, ke0t, ke1s, ke1t, kp = jax.random.split(key, 7)
    x = jax.random.normal(kx, (n0_src, in_channels), jnp.float32)

    edge_index0 = jnp.stack([
        jax.random.randint(ke0s, (n_edges0,), 0, n0_src),
        jax.random.randint(ke0t, (n_edges0,), 0, n0_tgt),
    ])
    edge_index1 = jnp.stack([
        jax.random.randint(ke1s, (n_edges1,), 0, n1_src),
        jax.random.randint(ke1t, (n_edges1,), 0, n1_tgt),
    ])
    adjs = [
        (edge_index0, None, (n0_src, n0_tgt)),
        (edge_index1, None, (n1_src, n1_tgt)),
    ]

    params = init_sage_params(kp, in_channels, hidden_channels, out_channels,
                              num_layers)

    # One-time packing (hoisted out of the forward path).
    packed_params = pack_sage_params(params)
    dense_adjs = build_dense_adjs(adjs)

    out = sage_forward(x, dense_adjs, packed_params, out_channels)
    out = jax.block_until_ready(out)
    assert out.shape == (n1_tgt, out_channels), out.shape

    # f32 reference check (kernel uses bf16 MXU operands with f32 accumulation,
    # so allow a few-percent tolerance).
    ref = jax.block_until_ready(sage_forward_ref(x, adjs, params))
    np.testing.assert_allclose(np.asarray(out), np.asarray(ref),
                               rtol=1e-1, atol=1.5e-1)

    print("KERNEL_OK")
</pallas_src>

<mosaic_0001>
module attributes {stable_mosaic.version = 11 : i64} {
  func.func @_sage_layer_kernel(%arg0: i32, %arg1: i32, %arg2: memref<128x128xbf16, #tpu.memory_space<vmem>>, %arg3: memref<128x128xbf16, #tpu.memory_space<vmem>>, %arg4: memref<128x1xf32, #tpu.memory_space<vmem>>, %arg5: memref<128x128xbf16, #tpu.memory_space<vmem>>, %arg6: memref<128x128xbf16, #tpu.memory_space<vmem>>, %arg7: memref<128x128xbf16, #tpu.memory_space<vmem>>, %arg8: memref<1x128xf32, #tpu.memory_space<vmem>>, %arg9: memref<128x128xbf16, #tpu.memory_space<vmem>>, %arg10: memref<128x128xf32, #tpu.memory_space<vmem>>) attributes {dimension_semantics = [#tpu.dimension_semantics<parallel>, #tpu.dimension_semantics<arbitrary>], iteration_bounds = array<i64: 1, 1>, scalar_prefetch = 0 : i64, scratch_operands = 1 : i64, tpu.core_type = #tpu.core_type<tc>, window_params = [{transform_indices = @transform_0, window_bounds = array<i64: 128, 128>}, {transform_indices = @transform_1, window_bounds = array<i64: 128, 128>}, {transform_indices = @transform_2, window_bounds = array<i64: 128, 1>}, {transform_indices = @transform_3, window_bounds = array<i64: 128, 128>}, {pipeline_mode = #tpu.pipeline_mode<synchronous>, transform_indices = @transform_4, window_bounds = array<i64: 128, 128>}, {pipeline_mode = #tpu.pipeline_mode<synchronous>, transform_indices = @transform_5, window_bounds = array<i64: 128, 128>}, {pipeline_mode = #tpu.pipeline_mode<synchronous>, transform_indices = @transform_6, window_bounds = array<i64: 1, 128>}, {transform_indices = @transform_7, window_bounds = array<i64: 128, 128>}]} {
    %c0_i32 = arith.constant 0 : i32
    %0 = arith.cmpi eq, %arg1, %c0_i32 : i32
    %1 = arith.extui %0 : i1 to i32
    %c0_i32_0 = arith.constant 0 : i32
    %2 = arith.cmpi ne, %1, %c0_i32_0 : i32
    scf.if %2 {
      %cst_10 = arith.constant 0.000000e+00 : f32
      %12 = vector.broadcast %cst_10 : f32 to vector<128x128xf32>
      %c0_11 = arith.constant 0 : index
      %c0_12 = arith.constant 0 : index
      %13 = vector.load %arg10[%c0_11, %c0_12] : memref<128x128xf32, #tpu.memory_space<vmem>>, vector<128x128xf32>
      tpu.vector_store %arg10[%c0_11, %c0_12], %12 {strides = array<i32>} : memref<128x128xf32, #tpu.memory_space<vmem>>, vector<128x128xf32>,
    } else {
    }
    %c0 = arith.constant 0 : index
    %c0_1 = arith.constant 0 : index
    %3 = vector.load %arg10[%c0, %c0_1] : memref<128x128xf32, #tpu.memory_space<vmem>>, vector<128x128xf32>
    %c0_2 = arith.constant 0 : index
    %c0_3 = arith.constant 0 : index
    %4 = vector.load %arg2[%c0_2, %c0_3] : memref<128x128xbf16, #tpu.memory_space<vmem>>, vector<128x128xbf16>
    %c0_4 = arith.constant 0 : index
    %c0_5 = arith.constant 0 : index
    %5 = vector.load %arg3[%c0_4, %c0_5] : memref<128x128xbf16, #tpu.memory_space<vmem>>, vector<128x128xbf16>
    %cst = arith.constant dense<0.000000e+00> : vector<128x128xf32>
    %6 = tpu.matmul %4, %5, %cst {dimension_numbers = #tpu.dot_dimension_numbers<[1], [0], [0], [1], [0, 0, 1, 1], [], []>} : vector<128x128xbf16>, vector<128x128xbf16>, vector<128x128xf32> -> vector<128x128xf32>
    %7 = arith.addf %3, %6 : vector<128x128xf32>
    %c0_6 = arith.constant 0 : index
    %c0_7 = arith.constant 0 : index
    %8 = vector.load %arg10[%c0_6, %c0_7] : memref<128x128xf32, #tpu.memory_space<vmem>>, vector<128x128xf32>
    tpu.vector_store %arg10[%c0_6, %c0_7], %7 {strides = array<i32>} : memref<128x128xf32, #tpu.memory_space<vmem>>, vector<128x128xf32>,
    %c0_i32_8 = arith.constant 0 : i32
    %9 = arith.cmpi eq, %arg1, %c0_i32_8 : i32
    %10 = arith.extui %9 : i1 to i32
    %c0_i32_9 = arith.constant 0 : i32
    %11 = arith.cmpi ne, %10, %c0_i32_9 : i32
    scf.if %11 {
      %c0_10 = arith.constant 0 : index
      %c0_11 = arith.constant 0 : index
      %12 = vector.load %arg10[%c0_10, %c0_11] : memref<128x128xf32, #tpu.memory_space<vmem>>, vector<128x128xf32>
      %c0_12 = arith.constant 0 : index
      %c0_13 = arith.constant 0 : index
      %13 = vector.load %arg4[%c0_12, %c0_13] : memref<128x1xf32, #tpu.memory_space<vmem>>, vector<128x1xf32>
      %14 = vector.broadcast %13 : vector<128x1xf32> to vector<128x128xf32>
      %15 = arith.mulf %12, %14 : vector<128x128xf32>
      %16 = arith.truncf %15 : vector<128x128xf32> to vector<128x128xbf16>
      %c0_14 = arith.constant 0 : index
      %c0_15 = arith.constant 0 : index
      %17 = vector.load %arg6[%c0_14, %c0_15] : memref<128x128xbf16, #tpu.memory_space<vmem>>, vector<128x128xbf16>
      %cst_16 = arith.constant dense<0.000000e+00> : vector<128x128xf32>
      %18 = tpu.matmul %16, %17, %cst_16 {dimension_numbers = #tpu.dot_dimension_numbers<[1], [0], [0], [1], [0, 0, 1, 1], [], []>} : vector<128x128xbf16>, vector<128x128xbf16>, vector<128x128xf32> -> vector<128x128xf32>
      %c0_17 = arith.constant 0 : index
      %c0_18 = arith.constant 0 : index
      %19 = vector.load %arg5[%c0_17, %c0_18] : memref<128x128xbf16, #tpu.memory_space<vmem>>, vector<128x128xbf16>
      %c0_19 = arith.constant 0 : index
      %c0_20 = arith.constant 0 : index
      %20 = vector.load %arg7[%c0_19, %c0_20] : memref<128x128xbf16, #tpu.memory_space<vmem>>, vector<128x128xbf16>
      %cst_21 = arith.constant dense<0.000000e+00> : vector<128x128xf32>
      %21 = tpu.matmul %19, %20, %cst_21 {dimension_numbers = #tpu.dot_dimension_numbers<[1], [0], [0], [1], [0, 0, 1, 1], [], []>} : vector<128x128xbf16>, vector<128x128xbf16>, vector<128x128xf32> -> vector<128x128xf32>
      %22 = arith.addf %18, %21 : vector<128x128xf32>
      %c0_22 = arith.constant 0 : index
      %c0_23 = arith.constant 0 : index
      %23 = vector.load %arg8[%c0_22, %c0_23] : memref<1x128xf32, #tpu.memory_space<vmem>>, vector<1x128xf32>
      %24 = vector.broadcast %23 : vector<1x128xf32> to vector<128x128xf32>
      %25 = arith.addf %22, %24 : vector<128x128xf32>
      %cst_24 = arith.constant 0.000000e+00 : f32
      %26 = vector.broadcast %cst_24 : f32 to vector<128x128xf32>
      %27 = arith.maximumf %25, %26 : vector<128x128xf32>
      %28 = arith.truncf %27 : vector<128x128xf32> to vector<128x128xbf16>
      %c0_25 = arith.constant 0 : index
      %c0_26 = arith.constant 0 : index
      %29 = vector.load %arg9[%c0_25, %c0_26] : memref<128x128xbf16, #tpu.memory_space<vmem>>, vector<128x128xbf16>
      tpu.vector_store %arg9[%c0_25, %c0_26], %28 {strides = array<i32>} : memref<128x128xbf16, #tpu.memory_space<vmem>>, vector<128x128xbf16>,
    } else {
    }
    return
  }
  func.func @transform_0(%arg0: i32, %arg1: i32) -> (i32, i32) {
    %c0_i32 = arith.constant 0 : i32
    return %arg0, %arg1 : i32, i32
  }
  func.func @transform_1(%arg0: i32, %arg1: i32) -> (i32, i32) {
    %c0_i32 = arith.constant 0 : i32
    %c0_i32_0 = arith.constant 0 : i32
    return %arg1, %c0_i32 : i32, i32
  }
  func.func @transform_2(%arg0: i32, %arg1: i32) -> (i32, i32) {
    %c0_i32 = arith.constant 0 : i32
    %c0_i32_0 = arith.constant 0 : i32
    return %arg0, %c0_i32 : i32, i32
  }
  func.func @transform_3(%arg0: i32, %arg1: i32) -> (i32, i32) {
    %c0_i32 = arith.constant 0 : i32
    %c0_i32_0 = arith.constant 0 : i32
    return %arg0, %c0_i32 : i32, i32
  }
  func.func @transform_4(%arg0: i32, %arg1: i32) -> (i32, i32) {
    %c0_i32 = arith.constant 0 : i32
    %c0_i32_0 = arith.constant 0 : i32
    %c0_i32_1 = arith.constant 0 : i32
    return %c0_i32, %c0_i32_0 : i32, i32
  }
  func.func @transform_5(%arg0: i32, %arg1: i32) -> (i32, i32) {
    %c0_i32 = arith.constant 0 : i32
    %c0_i32_0 = arith.constant 0 : i32
    %c0_i32_1 = arith.constant 0 : i32
    return %c0_i32, %c0_i32_0 : i32, i32
  }
  func.func @transform_6(%arg0: i32, %arg1: i32) -> (i32, i32) {
    %c0_i32 = arith.constant 0 : i32
    %c0_i32_0 = arith.constant 0 : i32
    %c0_i32_1 = arith.constant 0 : i32
    return %c0_i32, %c0_i32_0 : i32, i32
  }
  func.func @transform_7(%arg0: i32, %arg1: i32) -> (i32, i32) {
    %c0_i32 = arith.constant 0 : i32
    %c0_i32_0 = arith.constant 0 : i32
    return %arg0, %c0_i32 : i32, i32
  }
}

</mosaic_0001>

<llo_original>
// kernel: tpu_custom_call.1
$region0: #{tpu_custom_call.1}
  #allocation0 [shape = 'u32[]', space=smem, size = 0x4, offset = 0x4, fixed_abs, tag = 'smem constant byte address 0x4 - core index']
  #allocation1 [shape = 'u32[144,128]{1,0:T(1,128)}', space=vmem, size = 0x12000, scoped, tag = 'internal scratch']
  #allocation2 [shape = 'f32[128,128]{1,0:T(8,128)}', space=vmem, size = 0x10000, scoped, tag = 'scratch operand']
  %s0 = inlined_call_operand.vmem [shape: bf16[128,128], index: 0, kind: input, shape index: {}]
  %s1 = inlined_call_operand.vmem [shape: bf16[128,128], index: 1, kind: input, shape index: {}]
  %s2 = inlined_call_operand.vmem [shape: f32[128,1], index: 2, kind: input, shape index: {}]
  %s3 = inlined_call_operand.hbm [shape: bf16[128,128], index: 3, kind: input, shape index: {}]
  %s4 = inlined_call_operand.hbm [shape: bf16[128,128], index: 4, kind: input, shape index: {}]
  %s5 = inlined_call_operand.hbm [shape: bf16[128,128], index: 5, kind: input, shape index: {}]
  %s6 = inlined_call_operand.vmem [shape: f32[1,128], index: 6, kind: input, shape index: {}]
  %s7 = inlined_call_operand.hbm [shape: bf16[128,128], index: 7, kind: output, shape index: {}]
  %s8 = sld [smem:[#allocation0]]
  $region58: #{tpu_custom_call.1} parent=0
    _
  %s10 = ssub.s32 1, %s8
  %s11 = scalar_select 0, %s10, %s8
  $region1: #{tpu_custom_call.1} parent=0
    #allocation3 [shape = 'u8[32768]{0}', space=vmem, size = 0x8000, scoped, tag = 'input window, operand 3, single buffered']
    #allocation4 [shape = 's32[1]{0}', space=sflag, size = 0x4, scoped, tag = 'scoped memory for tpu_custom_call.1']
    #allocation5 [shape = 's32[1]{0}', space=sflag, size = 0x4, scoped, tag = 'scoped memory for tpu_custom_call.1']
    #allocation6 [shape = 'u8[32768]{0}', space=vmem, size = 0x8000, scoped, tag = 'input window, operand 4, single buffered']
    #allocation7 [shape = 's32[1]{0}', space=sflag, size = 0x4, scoped, tag = 'scoped memory for tpu_custom_call.1']
    #allocation8 [shape = 'u8[32768]{0}', space=vmem, size = 0x8000, scoped, tag = 'input window, operand 5, single buffered']
    #allocation9 [shape = 'u8[32768]{0}', space=vmem, size = 0x8000, scoped, tag = 'output window, operand 0, single buffered']
    %12 = vsyncpa [#allocation4], 0
    %13 = vsyncpa [#allocation7], 0
    %14 = vsyncpa [#allocation5], 0
    // Predicated region
    $region2: #{tpu_custom_call.1} parent=1 // pred_check
      _
    $region3: #{tpu_custom_call.1} parent=1 // pred_check_branch
      %16 = sbr.rel (0) target = $region5
    $region4: #{tpu_custom_call.1} parent=1 // pred_region
      _
    $region5: #{tpu_custom_call.1} parent=1 // pred_fallthru
      _
    // Predicated region
    $region6: #{tpu_custom_call.1} parent=1 // pred_check
      _
    $region7: #{tpu_custom_call.1} parent=1 // pred_check_branch
      %18 = sbr.rel (0) target = $region9
    $region8: #{tpu_custom_call.1} parent=1 // pred_region
      _
    $region9: #{tpu_custom_call.1} parent=1 // pred_fallthru
      _
    // Predicated region
    $region10: #{tpu_custom_call.1} parent=1 // pred_check
      _
    $region11: #{tpu_custom_call.1} parent=1 // pred_check_branch
      %20 = sbr.rel (0) target = $region13
    $region12: #{tpu_custom_call.1} parent=1 // pred_region
      _
    $region13: #{tpu_custom_call.1} parent=1 // pred_fallthru
      _
    // Predicated region
    $region14: #{tpu_custom_call.1} parent=1 // pred_check
      _
    $region15: #{tpu_custom_call.1} parent=1 // pred_check_branch
      %22 = sbr.rel (0) target = $region17
    $region16: #{tpu_custom_call.1} parent=1 // pred_region
      %s24 = ssub.s32 1024, 1024
      %25 = vsyncadd [#allocation4], %s24
      %s26 = sshll.u32 [#allocation3], 4
      %s27 = int_to_ptr.vmem [resolvable:$true] %s26
      %32 = dma.hbm_to_vmem [thread:$0]  %s3, 1024, %s27, [#allocation4], 64, 64, 4
    $region17: #{tpu_custom_call.1} parent=1 // pred_fallthru
      _
    // Predicated region
    $region18: #{tpu_custom_call.1} parent=1 // pred_check
      _
    $region19: #{tpu_custom_call.1} parent=1 // pred_check_branch
      %34 = sbr.rel (0) target = $region21
    $region20: #{tpu_custom_call.1} parent=1 // pred_region
      %s36 = ssub.s32 1024, 1024
      %37 = vsyncadd [#allocation7], %s36
      %s38 = sshll.u32 [#allocation6], 4
      %s39 = int_to_ptr.vmem [resolvable:$true] %s38
      %44 = dma.hbm_to_vmem [thread:$0]  %s4, 1024, %s39, [#allocation7], 64, 64, 4
    $region21: #{tpu_custom_call.1} parent=1 // pred_fallthru
      _
    // Predicated region
    $region22: #{tpu_custom_call.1} parent=1 // pred_check
      _
    $region23: #{tpu_custom_call.1} parent=1 // pred_check_branch
      %46 = sbr.rel (0) target = $region25
    $region24: #{tpu_custom_call.1} parent=1 // pred_region
      %s48 = ssub.s32 1024, 1024
      %49 = vsyncadd [#allocation7], %s48
      %s50 = sshll.u32 [#allocation8], 4
      %s51 = int_to_ptr.vmem [resolvable:$true] %s50
      %56 = dma.hbm_to_vmem [thread:$0]  %s5, 1024, %s51, [#allocation7], 64, 64, 4
    $region25: #{tpu_custom_call.1} parent=1 // pred_fallthru
      _
    // Predicated region
    $region26: #{tpu_custom_call.1} parent=1 // pred_check
      _
    $region27: #{tpu_custom_call.1} parent=1 // pred_check_branch
      %58 = sbr.rel (0) target = $region29
    $region28: #{tpu_custom_call.1} parent=1 // pred_region
      _
    $region29: #{tpu_custom_call.1} parent=1 // pred_fallthru
      _
    // Predicated region
    $region30: #{tpu_custom_call.1} parent=1 // pred_check
      _
    $region31: #{tpu_custom_call.1} parent=1 // pred_check_branch
      %60 = sbr.rel (0) target = $region33
    $region32: #{tpu_custom_call.1} parent=1 // pred_region
      %61 = dma.done [#allocation4], 1024
    $region33: #{tpu_custom_call.1} parent=1 // pred_fallthru
      _
    // Predicated region
    $region34: #{tpu_custom_call.1} parent=1 // pred_check
      _
    $region35: #{tpu_custom_call.1} parent=1 // pred_check_branch
      %63 = sbr.rel (0) target = $region37
    $region36: #{tpu_custom_call.1} parent=1 // pred_region
      %64 = dma.done [#allocation7], 1024
    $region37: #{tpu_custom_call.1} parent=1 // pred_fallthru
      _
    // Predicated region
    $region38: #{tpu_custom_call.1} parent=1 // pred_check
      _
    $region39: #{tpu_custom_call.1} parent=1 // pred_check_branch
      %66 = sbr.rel (0) target = $region41
    $region40: #{tpu_custom_call.1} parent=1 // pred_region
      %67 = dma.done [#allocation7], 1024
    $region41: #{tpu_custom_call.1} parent=1 // pred_fallthru
      _
    %p69 = scmp.eq.s32.totalorder 0, 0
    // Predicated region
    $region42: #{tpu_custom_call.1} parent=1 // pred_check
      %p70 = pneg %p69
    $region43: #{tpu_custom_call.1} parent=1 // pred_check_branch
      %72 = sbr.rel (%p70) target = $region45
    $region44: #{tpu_custom_call.1} parent=1 // pred_region
      %73 = vst [vmem:[#allocation2] sm:$0xff] 0.0
      %74 = vst [vmem:[#allocation2 + $0x8] sm:$0xff] 0.0
      %75 = vst [vmem:[#allocation2 + $0x10] sm:$0xff] 0.0
      %76 = vst [vmem:[#allocation2 + $0x18] sm:$0xff] 0.0
      %77 = vst [vmem:[#allocation2 + $0x20] sm:$0xff] 0.0
      %78 = vst [vmem:[#allocation2 + $0x28] sm:$0xff] 0.0
      %79 = vst [vmem:[#allocation2 + $0x30] sm:$0xff] 0.0
      %80 = vst [vmem:[#allocation2 + $0x38] sm:$0xff] 0.0
      %81 = vst [vmem:[#allocation2 + $0x40] sm:$0xff] 0.0
      %82 = vst [vmem:[#allocation2 + $0x48] sm:$0xff] 0.0
      %83 = vst [vmem:[#allocation2 + $0x50] sm:$0xff] 0.0
      %84 = vst [vmem:[#allocation2 + $0x58] sm:$0xff] 0.0
      %85 = vst [vmem:[#allocation2 + $0x60] sm:$0xff] 0.0
      %86 = vst [vmem:[#allocation2 + $0x68] sm:$0xff] 0.0
      %87 = vst [vmem:[#allocation2 + $0x70] sm:$0xff] 0.0
      %88 = vst [vmem:[#allocation2 + $0x78] sm:$0xff] 0.0
    $region45: #{tpu_custom_call.1} parent=1 // pred_fallthru
      _
    %v89 = vld [vmem:[#allocation2] sm:$0xff]
    %v90 = vld [vmem:[#allocation2 + $0x8] sm:$0xff]
    %v91 = vld [vmem:[#allocation2 + $0x10] sm:$0xff]
    %v92 = vld [vmem:[#allocation2 + $0x18] sm:$0xff]
    %v93 = vld [vmem:[#allocation2 + $0x20] sm:$0xff]
    %v94 = vld [vmem:[#allocation2 + $0x28] sm:$0xff]
    %v95 = vld [vmem:[#allocation2 + $0x30] sm:$0xff]
    %v96 = vld [vmem:[#allocation2 + $0x38] sm:$0xff]
    %v97 = vld [vmem:[#allocation2 + $0x40] sm:$0xff]
    %v98 = vld [vmem:[#allocation2 + $0x48] sm:$0xff]
    %v99 = vld [vmem:[#allocation2 + $0x50] sm:$0xff]
    %v100 = vld [vmem:[#allocation2 + $0x58] sm:$0xff]
    %v101 = vld [vmem:[#allocation2 + $0x60] sm:$0xff]
    %v102 = vld [vmem:[#allocation2 + $0x68] sm:$0xff]
    %v103 = vld [vmem:[#allocation2 + $0x70] sm:$0xff]
    %v104 = vld [vmem:[#allocation2 + $0x78] sm:$0xff]
    %v105 = vld [vmem:[%s0] sm:$0xf]
    %v106 = vld [vmem:[%s0 + $0x4] sm:$0xf]
    %v107 = vld [vmem:[%s0 + $0x8] sm:$0xf]
    %v108 = vld [vmem:[%s0 + $0xc] sm:$0xf]
    %v109 = vld [vmem:[%s0 + $0x10] sm:$0xf]
    %v110 = vld [vmem:[%s0 + $0x14] sm:$0xf]
    %v111 = vld [vmem:[%s0 + $0x18] sm:$0xf]
    %v112 = vld [vmem:[%s0 + $0x1c] sm:$0xf]
    %v113 = vld [vmem:[%s0 + $0x20] sm:$0xf]
    %v114 = vld [vmem:[%s0 + $0x24] sm:$0xf]
    %v115 = vld [vmem:[%s0 + $0x28] sm:$0xf]
    %v116 = vld [vmem:[%s0 + $0x2c] sm:$0xf]
    %v117 = vld [vmem:[%s0 + $0x30] sm:$0xf]
    %v118 = vld [vmem:[%s0 + $0x34] sm:$0xf]
    %v119 = vld [vmem:[%s0 + $0x38] sm:$0xf]
    %v120 = vld [vmem:[%s0 + $0x3c] sm:$0xf]
    %v121 = vld [vmem:[%s1] sm:$0xf]
    %v122 = vld [vmem:[%s1 + $0x4] sm:$0xf]
    %v123 = vld [vmem:[%s1 + $0x8] sm:$0xf]
    %v124 = vld [vmem:[%s1 + $0xc] sm:$0xf]
    %v125 = vld [vmem:[%s1 + $0x10] sm:$0xf]
    %v126 = vld [vmem:[%s1 + $0x14] sm:$0xf]
    %v127 = vld [vmem:[%s1 + $0x18] sm:$0xf]
    %v128 = vld [vmem:[%s1 + $0x1c] sm:$0xf]
    %v129 = vld [vmem:[%s1 + $0x20] sm:$0xf]
    %v130 = vld [vmem:[%s1 + $0x24] sm:$0xf]
    %v131 = vld [vmem:[%s1 + $0x28] sm:$0xf]
    %v132 = vld [vmem:[%s1 + $0x2c] sm:$0xf]
    %v133 = vld [vmem:[%s1 + $0x30] sm:$0xf]
    %v134 = vld [vmem:[%s1 + $0x34] sm:$0xf]
    %v135 = vld [vmem:[%s1 + $0x38] sm:$0xf]
    %v136 = vld [vmem:[%s1 + $0x3c] sm:$0xf]
    %v153 = vunpack.c.l.b16 %v105
    %v154 = vunpack.c.l.b16 %v106
    %v155 = vunpack.c.l.b16 %v107
    %v156 = vunpack.c.l.b16 %v108
    %v157 = vunpack.c.l.b16 %v109
    %v158 = vunpack.c.l.b16 %v110
    %v159 = vunpack.c.l.b16 %v111
    %v160 = vunpack.c.l.b16 %v112
    %v161 = vunpack.c.l.b16 %v113
    %v162 = vunpack.c.l.b16 %v114
    %v163 = vunpack.c.l.b16 %v115
    %v164 = vunpack.c.l.b16 %v116
    %v165 = vunpack.c.l.b16 %v117
    %v166 = vunpack.c.l.b16 %v118
    %v167 = vunpack.c.l.b16 %v119
    %v168 = vunpack.c.l.b16 %v120
    %v169 = vpack.c.b16 %v154, %v153
    %v170 = vpack.c.b16 %v156, %v155
    %v171 = vpack.c.b16 %v158, %v157
    %v172 = vpack.c.b16 %v160, %v159
    %v173 = vpack.c.b16 %v162, %v161
    %v174 = vpack.c.b16 %v164, %v163
    %v175 = vpack.c.b16 %v166, %v165
    %v176 = vpack.c.b16 %v168, %v167
    %v201 = vunpack.c.l.b16 %v121
    %v202 = vunpack.c.l.b16 %v122
    %v203 = vunpack.c.l.b16 %v123
    %v204 = vunpack.c.l.b16 %v124
    %v205 = vunpack.c.l.b16 %v125
    %v206 = vunpack.c.l.b16 %v126
    %v207 = vunpack.c.l.b16 %v127
    %v208 = vunpack.c.l.b16 %v128
    %v209 = vunpack.c.l.b16 %v129
    %v210 = vunpack.c.l.b16 %v130
    %v211 = vunpack.c.l.b16 %v131
    %v212 = vunpack.c.l.b16 %v132
    %v213 = vunpack.c.l.b16 %v133
    %v214 = vunpack.c.l.b16 %v134
    %v215 = vunpack.c.l.b16 %v135
    %v216 = vunpack.c.l.b16 %v136
    %v217 = vpack.c.b16 %v202, %v201
    %v218 = vpack.c.b16 %v204, %v203
    %v219 = vpack.c.b16 %v206, %v205
    %v220 = vpack.c.b16 %v208, %v207
    %v221 = vpack.c.b16 %v210, %v209
    %v222 = vpack.c.b16 %v212, %v211
    %v223 = vpack.c.b16 %v214, %v213
    %v224 = vpack.c.b16 %v216, %v215
    %233 = vmatprep.subr.bf16.mxu0 0
    %234 = vmatpush1.bf16.msra.mxu0 %v217
    %235 = vmatprep.subr.bf16.mxu0 0
    %236 = vmatpush1.bf16.msra.mxu0 %v218
    %237 = vmatprep.subr.bf16.mxu0 0
    %238 = vmatpush1.bf16.msra.mxu0 %v219
    %239 = vmatprep.subr.bf16.mxu0 0
    %240 = vmatpush1.bf16.msra.mxu0 %v220
    %241 = vmatprep.subr.bf16.mxu0 0
    %242 = vmatpush1.bf16.msra.mxu0 %v221
    %243 = vmatprep.subr.bf16.mxu0 0
    %244 = vmatpush1.bf16.msra.mxu0 %v222
    %245 = vmatprep.subr.bf16.mxu0 0
    %246 = vmatpush1.bf16.msra.mxu0 %v223
    %247 = vmatprep.subr.bf16.mxu0 0
    %248 = vmatpush1.bf16.msra.mxu0 %v224
    %249 = vmatprep.subr.bf16.mxu0 0
    %250 = vmatpush1.bf16.msra.mxu0 0
    %251 = vmatprep.subr.bf16.mxu0 0
    %252 = vmatpush1.bf16.msra.mxu0 0
    %253 = vmatprep.subr.bf16.mxu0 0
    %254 = vmatpush1.bf16.msra.mxu0 0
    %255 = vmatprep.subr.bf16.mxu0 0
    %256 = vmatpush1.bf16.msra.mxu0 0
    %257 = vmatprep.subr.bf16.mxu0 0
    %258 = vmatpush1.bf16.msra.mxu0 0
    %259 = vmatprep.subr.bf16.mxu0 0
    %260 = vmatpush1.bf16.msra.mxu0 0
    %261 = vmatprep.subr.bf16.mxu0 0
    %262 = vmatpush1.bf16.msra.mxu0 0
    %263 = vmatprep.subr.bf16.mxu0 0
    %264 = vmatpush1.bf16.msra.mxu0 0
    %265 = vmatprep.mubr.bf16.mxu0 0
    %266 = vmatmul.mubr.bf16.gmra.mrb[0].mxu0 %v169
    %v267 = vpop.f32.mrb[0].mxu0
    %v268 = vadd.f32 0.0, %v267
    %v269 = vpop.f32.mrb[0].mxu0
    %v270 = vpop.f32.mrb[0].mxu0
    %v271 = vadd.f32 0.0, %v270
    %v272 = vpop.f32.mrb[0].mxu0
    %273 = vmatprep.mubr.bf16.mxu0 0
    %274 = vmatmul.mubr.bf16.gmra.mrb[0].mxu0 %v170
    %v275 = vpop.f32.mrb[0].mxu0
    %v276 = vadd.f32 0.0, %v275
    %v277 = vpop.f32.mrb[0].mxu0
    %v278 = vpop.f32.mrb[0].mxu0
    %v279 = vadd.f32 0.0, %v278
    %v280 = vpop.f32.mrb[0].mxu0
    %281 = vmatprep.mubr.bf16.mxu0 0
    %282 = vmatmul.mubr.bf16.gmra.mrb[0].mxu0 %v171
    %v283 = vpop.f32.mrb[0].mxu0
    %v284 = vadd.f32 0.0, %v283
    %v285 = vpop.f32.mrb[0].mxu0
    %v286 = vpop.f32.mrb[0].mxu0
    %v287 = vadd.f32 0.0, %v286
    %v288 = vpop.f32.mrb[0].mxu0
    %289 = vmatprep.mubr.bf16.mxu0 0
    %290 = vmatmul.mubr.bf16.gmra.mrb[0].mxu0 %v172
    %v291 = vpop.f32.mrb[0].mxu0
    %v292 = vadd.f32 0.0, %v291
    %v293 = vpop.f32.mrb[0].mxu0
    %v294 = vpop.f32.mrb[0].mxu0
    %v295 = vadd.f32 0.0, %v294
    %v296 = vpop.f32.mrb[0].mxu0
    %297 = vmatprep.mubr.bf16.mxu0 0
    %298 = vmatmul.mubr.bf16.gmra.mrb[0].mxu0 %v173
    %v299 = vpop.f32.mrb[0].mxu0
    %v300 = vadd.f32 0.0, %v299
    %v301 = vpop.f32.mrb[0].mxu0
    %v302 = vpop.f32.mrb[0].mxu0
    %v303 = vadd.f32 0.0, %v302
    %v304 = vpop.f32.mrb[0].mxu0
    %305 = vmatprep.mubr.bf16.mxu0 0
    %306 = vmatmul.mubr.bf16.gmra.mrb[0].mxu0 %v174
    %v307 = vpop.f32.mrb[0].mxu0
    %v308 = vadd.f32 0.0, %v307
    %v309 = vpop.f32.mrb[0].mxu0
    %v310 = vpop.f32.mrb[0].mxu0
    %v311 = vadd.f32 0.0, %v310
    %v312 = vpop.f32.mrb[0].mxu0
    %313 = vmatprep.mubr.bf16.mxu0 0
    %314 = vmatmul.mubr.bf16.gmra.mrb[0].mxu0 %v175
    %v315 = vpop.f32.mrb[0].mxu0
    %v316 = vadd.f32 0.0, %v315
    %v317 = vpop.f32.mrb[0].mxu0
    %v318 = vpop.f32.mrb[0].mxu0
    %v319 = vadd.f32 0.0, %v318
    %v320 = vpop.f32.mrb[0].mxu0
    %321 = vmatprep.mubr.bf16.mxu0 0
    %322 = vmatmul.mubr.bf16.gmra.mrb[0].mxu0 %v176
    %v323 = vpop.f32.mrb[0].mxu0
    %v324 = vadd.f32 0.0, %v323
    %v325 = vpop.f32.mrb[0].mxu0
    %v326 = vpop.f32.mrb[0].mxu0
    %v327 = vadd.f32 0.0, %v326
    %v328 = vpop.f32.mrb[0].mxu0
    %329 = vdwg.mxu0
    %v330 = vadd.f32 %v89, %v268
    %v331 = vadd.f32 %v90, %v271
    %v332 = vadd.f32 %v91, %v276
    %v333 = vadd.f32 %v92, %v279
    %v334 = vadd.f32 %v93, %v284
    %v335 = vadd.f32 %v94, %v287
    %v336 = vadd.f32 %v95, %v292
    %v337 = vadd.f32 %v96, %v295
    %v338 = vadd.f32 %v97, %v300
    %v339 = vadd.f32 %v98, %v303
    %v340 = vadd.f32 %v99, %v308
    %v341 = vadd.f32 %v100, %v311
    %v342 = vadd.f32 %v101, %v316
    %v343 = vadd.f32 %v102, %v319
    %v344 = vadd.f32 %v103, %v324
    %v345 = vadd.f32 %v104, %v327
    %346 = vst [vmem:[#allocation2] sm:$0xff] %v330
    %347 = vst [vmem:[#allocation2 + $0x8] sm:$0xff] %v331
    %348 = vst [vmem:[#allocation2 + $0x10] sm:$0xff] %v332
    %349 = vst [vmem:[#allocation2 + $0x18] sm:$0xff] %v333
    %350 = vst [vmem:[#allocation2 + $0x20] sm:$0xff] %v334
    %351 = vst [vmem:[#allocation2 + $0x28] sm:$0xff] %v335
    %352 = vst [vmem:[#allocation2 + $0x30] sm:$0xff] %v336
    %353 = vst [vmem:[#allocation2 + $0x38] sm:$0xff] %v337
    %354 = vst [vmem:[#allocation2 + $0x40] sm:$0xff] %v338
    %355 = vst [vmem:[#allocation2 + $0x48] sm:$0xff] %v339
    %356 = vst [vmem:[#allocation2 + $0x50] sm:$0xff] %v340
    %357 = vst [vmem:[#allocation2 + $0x58] sm:$0xff] %v341
    %358 = vst [vmem:[#allocation2 + $0x60] sm:$0xff] %v342
    %359 = vst [vmem:[#allocation2 + $0x68] sm:$0xff] %v343
    %360 = vst [vmem:[#allocation2 + $0x70] sm:$0xff] %v344
    %361 = vst [vmem:[#allocation2 + $0x78] sm:$0xff] %v345
    // Predicated region
    $region46: #{tpu_custom_call.1} parent=1 // pred_check
      %p362 = pneg %p69
    $region47: #{tpu_custom_call.1} parent=1 // pred_check_branch
      %364 = sbr.rel (%p362) target = $region49
    $region48: #{tpu_custom_call.1} parent=1 // pred_region
      %v365 = vld [vmem:[#allocation2] sm:$0xff]
      %v366 = vld [vmem:[#allocation2 + $0x8] sm:$0xff]
      %v367 = vld [vmem:[#allocation2 + $0x10] sm:$0xff]
      %v368 = vld [vmem:[#allocation2 + $0x18] sm:$0xff]
      %v369 = vld [vmem:[#allocation2 + $0x20] sm:$0xff]
      %v370 = vld [vmem:[#allocation2 + $0x28] sm:$0xff]
      %v371 = vld [vmem:[#allocation2 + $0x30] sm:$0xff]
      %v372 = vld [vmem:[#allocation2 + $0x38] sm:$0xff]
      %v373 = vld [vmem:[#allocation2 + $0x40] sm:$0xff]
      %v374 = vld [vmem:[#allocation2 + $0x48] sm:$0xff]
      %v375 = vld [vmem:[#allocation2 + $0x50] sm:$0xff]
      %v376 = vld [vmem:[#allocation2 + $0x58] sm:$0xff]
      %v377 = vld [vmem:[#allocation2 + $0x60] sm:$0xff]
      %v378 = vld [vmem:[#allocation2 + $0x68] sm:$0xff]
      %v379 = vld [vmem:[#allocation2 + $0x70] sm:$0xff]
      %v380 = vld [vmem:[#allocation2 + $0x78] sm:$0xff]
      %v381 = vld [vmem:[%s2] sm:$0xff]
      %v382 = vld [vmem:[%s2 + $0x8] sm:$0xff]
      %v383 = vld [vmem:[%s2 + $0x10] sm:$0xff]
      %v384 = vld [vmem:[%s2 + $0x18] sm:$0xff]
      %v385 = vld [vmem:[%s2 + $0x20] sm:$0xff]
      %v386 = vld [vmem:[%s2 + $0x28] sm:$0xff]
      %v387 = vld [vmem:[%s2 + $0x30] sm:$0xff]
      %v388 = vld [vmem:[%s2 + $0x38] sm:$0xff]
      %v389 = vld [vmem:[%s2 + $0x40] sm:$0xff]
      %v390 = vld [vmem:[%s2 + $0x48] sm:$0xff]
      %v391 = vld [vmem:[%s2 + $0x50] sm:$0xff]
      %v392 = vld [vmem:[%s2 + $0x58] sm:$0xff]
      %v393 = vld [vmem:[%s2 + $0x60] sm:$0xff]
      %v394 = vld [vmem:[%s2 + $0x68] sm:$0xff]
      %v395 = vld [vmem:[%s2 + $0x70] sm:$0xff]
      %v396 = vld [vmem:[%s2 + $0x78] sm:$0xff]
      %398 = vset.pattern.permute.xlu0 0
      %399 = vperm.xlu0 %398, %v381
      %v400 = vpop.permute.xlu0 %399
      %403 = vset.pattern.permute.xlu0 0
      %404 = vperm.xlu0 %403, %v382
      %v405 = vpop.permute.xlu0 %404
      %408 = vset.pattern.permute.xlu0 0
      %409 = vperm.xlu0 %408, %v383
      %v410 = vpop.permute.xlu0 %409
      %413 = vset.pattern.permute.xlu0 0
      %414 = vperm.xlu0 %413, %v384
      %v415 = vpop.permute.xlu0 %414
      %418 = vset.pattern.permute.xlu0 0
      %419 = vperm.xlu0 %418, %v385
      %v420 = vpop.permute.xlu0 %419
      %423 = vset.pattern.permute.xlu0 0
      %424 = vperm.xlu0 %423, %v386
      %v425 = vpop.permute.xlu0 %424
      %428 = vset.pattern.permute.xlu0 0
      %429 = vperm.xlu0 %428, %v387
      %v430 = vpop.permute.xlu0 %429
      %433 = vset.pattern.permute.xlu0 0
      %434 = vperm.xlu0 %433, %v388
      %v435 = vpop.permute.xlu0 %434
      %438 = vset.pattern.permute.xlu0 0
      %439 = vperm.xlu0 %438, %v389
      %v440 = vpop.permute.xlu0 %439
      %443 = vset.pattern.permute.xlu0 0
      %444 = vperm.xlu0 %443, %v390
      %v445 = vpop.permute.xlu0 %444
      %448 = vset.pattern.permute.xlu0 0
      %449 = vperm.xlu0 %448, %v391
      %v450 = vpop.permute.xlu0 %449
      %453 = vset.pattern.permute.xlu0 0
      %454 = vperm.xlu0 %453, %v392
      %v455 = vpop.permute.xlu0 %454
      %458 = vset.pattern.permute.xlu0 0
      %459 = vperm.xlu0 %458, %v393
      %v460 = vpop.permute.xlu0 %459
      %463 = vset.pattern.permute.xlu0 0
      %464 = vperm.xlu0 %463, %v394
      %v465 = vpop.permute.xlu0 %464
      %468 = vset.pattern.permute.xlu0 0
      %469 = vperm.xlu0 %468, %v395
      %v470 = vpop.permute.xlu0 %469
      %473 = vset.pattern.permute.xlu0 0
      %474 = vperm.xlu0 %473, %v396
      %v475 = vpop.permute.xlu0 %474
      %v477 = vmul.f32 %v365, %v400
      %v478 = vmul.f32 %v366, %v405
      %v479 = vmul.f32 %v367, %v410
      %v480 = vmul.f32 %v368, %v415
      %v481 = vmul.f32 %v369, %v420
      %v482 = vmul.f32 %v370, %v425
      %v483 = vmul.f32 %v371, %v430
      %v484 = vmul.f32 %v372, %v435
      %v485 = vmul.f32 %v373, %v440
      %v486 = vmul.f32 %v374, %v445
      %v487 = vmul.f32 %v375, %v450
      %v488 = vmul.f32 %v376, %v455
      %v489 = vmul.f32 %v377, %v460
      %v490 = vmul.f32 %v378, %v465
      %v491 = vmul.f32 %v379, %v470
      %v492 = vmul.f32 %v380, %v475
      %v493 = vpack.c.bf16 %v478, %v477
      %v494 = vpack.c.bf16 %v480, %v479
      %v495 = vpack.c.bf16 %v482, %v481
      %v496 = vpack.c.bf16 %v484, %v483
      %v497 = vpack.c.bf16 %v486, %v485
      %v498 = vpack.c.bf16 %v488, %v487
      %v499 = vpack.c.bf16 %v490, %v489
      %v500 = vpack.c.bf16 %v492, %v491
      %v501 = vld [vmem:[#allocation6] sm:$0xf]
      %v502 = vld [vmem:[#allocation6 + $0x4] sm:$0xf]
      %v503 = vld [vmem:[#allocation6 + $0x8] sm:$0xf]
      %v504 = vld [vmem:[#allocation6 + $0xc] sm:$0xf]
      %v505 = vld [vmem:[#allocation6 + $0x10] sm:$0xf]
      %v506 = vld [vmem:[#allocation6 + $0x14] sm:$0xf]
      %v507 = vld [vmem:[#allocation6 + $0x18] sm:$0xf]
      %v508 = vld [vmem:[#allocation6 + $0x1c] sm:$0xf]
      %v509 = vld [vmem:[#allocation6 + $0x20] sm:$0xf]
      %v510 = vld [vmem:[#allocation6 + $0x24] sm:$0xf]
      %v511 = vld [vmem:[#allocation6 + $0x28] sm:$0xf]
      %v512 = vld [vmem:[#allocation6 + $0x2c] sm:$0xf]
      %v513 = vld [vmem:[#allocation6 + $0x30] sm:$0xf]
      %v514 = vld [vmem:[#allocation6 + $0x34] sm:$0xf]
      %v515 = vld [vmem:[#allocation6 + $0x38] sm:$0xf]
      %v516 = vld [vmem:[#allocation6 + $0x3c] sm:$0xf]
      %v517 = vld [vmem:[#allocation3] sm:$0xf]
      %v518 = vld [vmem:[#allocation3 + $0x4] sm:$0xf]
      %v519 = vld [vmem:[#allocation3 + $0x8] sm:$0xf]
      %v520 = vld [vmem:[#allocation3 + $0xc] sm:$0xf]
      %v521 = vld [vmem:[#allocation3 + $0x10] sm:$0xf]
      %v522 = vld [vmem:[#allocation3 + $0x14] sm:$0xf]
      %v523 = vld [vmem:[#allocation3 + $0x18] sm:$0xf]
      %v524 = vld [vmem:[#allocation3 + $0x1c] sm:$0xf]
      %v525 = vld [vmem:[#allocation3 + $0x20] sm:$0xf]
      %v526 = vld [vmem:[#allocation3 + $0x24] sm:$0xf]
      %v527 = vld [vmem:[#allocation3 + $0x28] sm:$0xf]
      %v528 = vld [vmem:[#allocation3 + $0x2c] sm:$0xf]
      %v529 = vld [vmem:[#allocation3 + $0x30] sm:$0xf]
      %v530 = vld [vmem:[#allocation3 + $0x34] sm:$0xf]
      %v531 = vld [vmem:[#allocation3 + $0x38] sm:$0xf]
      %v532 = vld [vmem:[#allocation3 + $0x3c] sm:$0xf]
      %v533 = vld [vmem:[#allocation8] sm:$0xf]
      %v534 = vld [vmem:[#allocation8 + $0x4] sm:$0xf]
      %v535 = vld [vmem:[#allocation8 + $0x8] sm:$0xf]
      %v536 = vld [vmem:[#allocation8 + $0xc] sm:$0xf]
      %v537 = vld [vmem:[#allocation8 + $0x10] sm:$0xf]
      %v538 = vld [vmem:[#allocation8 + $0x14] sm:$0xf]
      %v539 = vld [vmem:[#allocation8 + $0x18] sm:$0xf]
      %v540 = vld [vmem:[#allocation8 + $0x1c] sm:$0xf]
      %v541 = vld [vmem:[#allocation8 + $0x20] sm:$0xf]
      %v542 = vld [vmem:[#allocation8 + $0x24] sm:$0xf]
      %v543 = vld [vmem:[#allocation8 + $0x28] sm:$0xf]
      %v544 = vld [vmem:[#allocation8 + $0x2c] sm:$0xf]
      %v545 = vld [vmem:[#allocation8 + $0x30] sm:$0xf]
      %v546 = vld [vmem:[#allocation8 + $0x34] sm:$0xf]
      %v547 = vld [vmem:[#allocation8 + $0x38] sm:$0xf]
      %v548 = vld [vmem:[#allocation8 + $0x3c] sm:$0xf]
      %v565 = vunpack.c.l.b16 %v517
      %v566 = vunpack.c.l.b16 %v518
      %v567 = vunpack.c.l.b16 %v519
      %v568 = vunpack.c.l.b16 %v520
      %v569 = vunpack.c.l.b16 %v521
      %v570 = vunpack.c.l.b16 %v522
      %v571 = vunpack.c.l.b16 %v523
      %v572 = vunpack.c.l.b16 %v524
      %v573 = vunpack.c.l.b16 %v525
      %v574 = vunpack.c.l.b16 %v526
      %v575 = vunpack.c.l.b16 %v527
      %v576 = vunpack.c.l.b16 %v528
      %v577 = vunpack.c.l.b16 %v529
      %v578 = vunpack.c.l.b16 %v530
      %v579 = vunpack.c.l.b16 %v531
      %v580 = vunpack.c.l.b16 %v532
      %v581 = vpack.c.b16 %v566, %v565
      %v582 = vpack.c.b16 %v568, %v567
      %v583 = vpack.c.b16 %v570, %v569
      %v584 = vpack.c.b16 %v572, %v571
      %v585 = vpack.c.b16 %v574, %v573
      %v586 = vpack.c.b16 %v576, %v575
      %v587 = vpack.c.b16 %v578, %v577
      %v588 = vpack.c.b16 %v580, %v579
      %v613 = vunpack.c.l.b16 %v533
      %v614 = vunpack.c.l.b16 %v534
      %v615 = vunpack.c.l.b16 %v535
      %v616 = vunpack.c.l.b16 %v536
      %v617 = vunpack.c.l.b16 %v537
      %v618 = vunpack.c.l.b16 %v538
      %v619 = vunpack.c.l.b16 %v539
      %v620 = vunpack.c.l.b16 %v540
      %v621 = vunpack.c.l.b16 %v541
      %v622 = vunpack.c.l.b16 %v542
      %v623 = vunpack.c.l.b16 %v543
      %v624 = vunpack.c.l.b16 %v544
      %v625 = vunpack.c.l.b16 %v545
      %v626 = vunpack.c.l.b16 %v546
      %v627 = vunpack.c.l.b16 %v547
      %v628 = vunpack.c.l.b16 %v548
      %v629 = vpack.c.b16 %v614, %v613
      %v630 = vpack.c.b16 %v616, %v615
      %v631 = vpack.c.b16 %v618, %v617
      %v632 = vpack.c.b16 %v620, %v619
      %v633 = vpack.c.b16 %v622, %v621
      %v634 = vpack.c.b16 %v624, %v623
      %v635 = vpack.c.b16 %v626, %v625
      %v636 = vpack.c.b16 %v628, %v627
      %645 = vmatprep.subr.bf16.mxu0 0
      %646 = vmatpush1.bf16.msra.mxu0 %v629
      %647 = vmatprep.subr.bf16.mxu0 0
      %648 = vmatpush1.bf16.msra.mxu0 %v630
      %649 = vmatprep.subr.bf16.mxu0 0
      %650 = vmatpush1.bf16.msra.mxu0 %v631
      %651 = vmatprep.subr.bf16.mxu0 0
      %652 = vmatpush1.bf16.msra.mxu0 %v632
      %653 = vmatprep.subr.bf16.mxu0 0
      %654 = vmatpush1.bf16.msra.mxu0 %v633
      %655 = vmatprep.subr.bf16.mxu0 0
      %656 = vmatpush1.bf16.msra.mxu0 %v634
      %657 = vmatprep.subr.bf16.mxu0 0
      %658 = vmatpush1.bf16.msra.mxu0 %v635
      %659 = vmatprep.subr.bf16.mxu0 0
      %660 = vmatpush1.bf16.msra.mxu0 %v636
      %661 = vmatprep.subr.bf16.mxu0 0
      %662 = vmatpush1.bf16.msra.mxu0 0
      %663 = vmatprep.subr.bf16.mxu0 0
      %664 = vmatpush1.bf16.msra.mxu0 0
      %665 = vmatprep.subr.bf16.mxu0 0
      %666 = vmatpush1.bf16.msra.mxu0 0
      %667 = vmatprep.subr.bf16.mxu0 0
      %668 = vmatpush1.bf16.msra.mxu0 0
      %669 = vmatprep.subr.bf16.mxu0 0
      %670 = vmatpush1.bf16.msra.mxu0 0
      %671 = vmatprep.subr.bf16.mxu0 0
      %672 = vmatpush1.bf16.msra.mxu0 0
      %673 = vmatprep.subr.bf16.mxu0 0
      %674 = vmatpush1.bf16.msra.mxu0 0
      %675 = vmatprep.subr.bf16.mxu0 0
      %676 = vmatpush1.bf16.msra.mxu0 0
      %677 = vmatprep.mubr.bf16.mxu0 0
      %678 = vmatmul.mubr.bf16.gmra.mrb[0].mxu0 %v581
      %v679 = vpop.f32.mrb[0].mxu0
      %v680 = vadd.f32 0.0, %v679
      %v681 = vpop.f32.mrb[0].mxu0
      %v682 = vpop.f32.mrb[0].mxu0
      %v683 = vadd.f32 0.0, %v682
      %v684 = vpop.f32.mrb[0].mxu0
      %685 = vmatprep.mubr.bf16.mxu0 0
      %686 = vmatmul.mubr.bf16.gmra.mrb[0].mxu0 %v582
      %v687 = vpop.f32.mrb[0].mxu0
      %v688 = vadd.f32 0.0, %v687
      %v689 = vpop.f32.mrb[0].mxu0
      %v690 = vpop.f32.mrb[0].mxu0
      %v691 = vadd.f32 0.0, %v690
      %v692 = vpop.f32.mrb[0].mxu0
      %693 = vmatprep.mubr.bf16.mxu0 0
      %694 = vmatmul.mubr.bf16.gmra.mrb[0].mxu0 %v583
      %v695 = vpop.f32.mrb[0].mxu0
      %v696 = vadd.f32 0.0, %v695
      %v697 = vpop.f32.mrb[0].mxu0
      %v698 = vpop.f32.mrb[0].mxu0
      %v699 = vadd.f32 0.0, %v698
      %v700 = vpop.f32.mrb[0].mxu0
      %701 = vmatprep.mubr.bf16.mxu0 0
      %702 = vmatmul.mubr.bf16.gmra.mrb[0].mxu0 %v584
      %v703 = vpop.f32.mrb[0].mxu0
      %v704 = vadd.f32 0.0, %v703
      %v705 = vpop.f32.mrb[0].mxu0
      %v706 = vpop.f32.mrb[0].mxu0
      %v707 = vadd.f32 0.0, %v706
      %v708 = vpop.f32.mrb[0].mxu0
      %709 = vmatprep.mubr.bf16.mxu0 0
      %710 = vmatmul.mubr.bf16.gmra.mrb[0].mxu0 %v585
      %v711 = vpop.f32.mrb[0].mxu0
      %v712 = vadd.f32 0.0, %v711
      %v713 = vpop.f32.mrb[0].mxu0
      %v714 = vpop.f32.mrb[0].mxu0
      %v715 = vadd.f32 0.0, %v714
      %v716 = vpop.f32.mrb[0].mxu0
      %717 = vmatprep.mubr.bf16.mxu0 0
      %718 = vmatmul.mubr.bf16.gmra.mrb[0].mxu0 %v586
      %v719 = vpop.f32.mrb[0].mxu0
      %v720 = vadd.f32 0.0, %v719
      %v721 = vpop.f32.mrb[0].mxu0
      %v722 = vpop.f32.mrb[0].mxu0
      %v723 = vadd.f32 0.0, %v722
      %v724 = vpop.f32.mrb[0].mxu0
      %725 = vmatprep.mubr.bf16.mxu0 0
      %726 = vmatmul.mubr.bf16.gmra.mrb[0].mxu0 %v587
      %v727 = vpop.f32.mrb[0].mxu0
      %v728 = vadd.f32 0.0, %v727
      %v729 = vpop.f32.mrb[0].mxu0
      %v730 = vpop.f32.mrb[0].mxu0
      %v731 = vadd.f32 0.0, %v730
      %v732 = vpop.f32.mrb[0].mxu0
      %733 = vmatprep.mubr.bf16.mxu0 0
      %734 = vmatmul.mubr.bf16.gmra.mrb[0].mxu0 %v588
      %v735 = vpop.f32.mrb[0].mxu0
      %v736 = vadd.f32 0.0, %v735
      %v737 = vpop.f32.mrb[0].mxu0
      %v738 = vpop.f32.mrb[0].mxu0
      %v739 = vadd.f32 0.0, %v738
      %v740 = vpop.f32.mrb[0].mxu0
      %741 = vdwg.mxu0
      %v758 = vunpack.c.l.b16 %v501
      %v759 = vunpack.c.l.b16 %v502
      %v760 = vunpack.c.l.b16 %v503
      %v761 = vunpack.c.l.b16 %v504
      %v762 = vunpack.c.l.b16 %v505
      %v763 = vunpack.c.l.b16 %v506
      %v764 = vunpack.c.l.b16 %v507
      %v765 = vunpack.c.l.b16 %v508
      %v766 = vunpack.c.l.b16 %v509
      %v767 = vunpack.c.l.b16 %v510
      %v768 = vunpack.c.l.b16 %v511
      %v769 = vunpack.c.l.b16 %v512
      %v770 = vunpack.c.l.b16 %v513
      %v771 = vunpack.c.l.b16 %v514
      %v772 = vunpack.c.l.b16 %v515
      %v773 = vunpack.c.l.b16 %v516
      %v774 = vpack.c.b16 %v759, %v758
      %v775 = vpack.c.b16 %v761, %v760
      %v776 = vpack.c.b16 %v763, %v762
      %v777 = vpack.c.b16 %v765, %v764
      %v778 = vpack.c.b16 %v767, %v766
      %v779 = vpack.c.b16 %v769, %v768
      %v780 = vpack.c.b16 %v771, %v770
      %v781 = vpack.c.b16 %v773, %v772
      %790 = vmatprep.subr.bf16.mxu0 0
      %791 = vmatpush1.bf16.msra.mxu0 %v774
      %792 = vmatprep.subr.bf16.mxu0 0
      %793 = vmatpush1.bf16.msra.mxu0 %v775
      %794 = vmatprep.subr.bf16.mxu0 0
      %795 = vmatpush1.bf16.msra.mxu0 %v776
      %796 = vmatprep.subr.bf16.mxu0 0
      %797 = vmatpush1.bf16.msra.mxu0 %v777
      %798 = vmatprep.subr.bf16.mxu0 0
      %799 = vmatpush1.bf16.msra.mxu0 %v778
      %800 = vmatprep.subr.bf16.mxu0 0
      %801 = vmatpush1.bf16.msra.mxu0 %v779
      %802 = vmatprep.subr.bf16.mxu0 0
      %803 = vmatpush1.bf16.msra.mxu0 %v780
      %804 = vmatprep.subr.bf16.mxu0 0
      %805 = vmatpush1.bf16.msra.mxu0 %v781
      %806 = vmatprep.subr.bf16.mxu0 0
      %807 = vmatpush1.bf16.msra.mxu0 0
      %808 = vmatprep.subr.bf16.mxu0 0
      %809 = vmatpush1.bf16.msra.mxu0 0
      %810 = vmatprep.subr.bf16.mxu0 0
      %811 = vmatpush1.bf16.msra.mxu0 0
      %812 = vmatprep.subr.bf16.mxu0 0
      %813 = vmatpush1.bf16.msra.mxu0 0
      %814 = vmatprep.subr.bf16.mxu0 0
      %815 = vmatpush1.bf16.msra.mxu0 0
      %816 = vmatprep.subr.bf16.mxu0 0
      %817 = vmatpush1.bf16.msra.mxu0 0
      %818 = vmatprep.subr.bf16.mxu0 0
      %819 = vmatpush1.bf16.msra.mxu0 0
      %820 = vmatprep.subr.bf16.mxu0 0
      %821 = vmatpush1.bf16.msra.mxu0 0
      %822 = vmatprep.mubr.bf16.mxu0 0
      %823 = vmatmul.mubr.bf16.gmra.mrb[0].mxu0 %v493
      %v824 = vpop.f32.mrb[0].mxu0
      %v825 = vadd.f32 %v680, %v824
      %v826 = vpop.f32.mrb[0].mxu0
      %v827 = vpop.f32.mrb[0].mxu0
      %v828 = vadd.f32 %v683, %v827
      %v829 = vpop.f32.mrb[0].mxu0
      %830 = vmatprep.mubr.bf16.mxu0 0
      %831 = vmatmul.mubr.bf16.gmra.mrb[0].mxu0 %v494
      %v832 = vpop.f32.mrb[0].mxu0
      %v833 = vadd.f32 %v688, %v832
      %v834 = vpop.f32.mrb[0].mxu0
      %v835 = vpop.f32.mrb[0].mxu0
      %v836 = vadd.f32 %v691, %v835
      %v837 = vpop.f32.mrb[0].mxu0
      %838 = vmatprep.mubr.bf16.mxu0 0
      %839 = vmatmul.mubr.bf16.gmra.mrb[0].mxu0 %v495
      %v840 = vpop.f32.mrb[0].mxu0
      %v841 = vadd.f32 %v696, %v840
      %v842 = vpop.f32.mrb[0].mxu0
      %v843 = vpop.f32.mrb[0].mxu0
      %v844 = vadd.f32 %v699, %v843
      %v845 = vpop.f32.mrb[0].mxu0
      %846 = vmatprep.mubr.bf16.mxu0 0
      %847 = vmatmul.mubr.bf16.gmra.mrb[0].mxu0 %v496
      %v848 = vpop.f32.mrb[0].mxu0
      %v849 = vadd.f32 %v704, %v848
      %v850 = vpop.f32.mrb[0].mxu0
      %v851 = vpop.f32.mrb[0].mxu0
      %v852 = vadd.f32 %v707, %v851
      %v853 = vpop.f32.mrb[0].mxu0
      %854 = vmatprep.mubr.bf16.mxu0 0
      %855 = vmatmul.mubr.bf16.gmra.mrb[0].mxu0 %v497
      %v856 = vpop.f32.mrb[0].mxu0
      %v857 = vadd.f32 %v712, %v856
      %v858 = vpop.f32.mrb[0].mxu0
      %v859 = vpop.f32.mrb[0].mxu0
      %v860 = vadd.f32 %v715, %v859
      %v861 = vpop.f32.mrb[0].mxu0
      %862 = vmatprep.mubr.bf16.mxu0 0
      %863 = vmatmul.mubr.bf16.gmra.mrb[0].mxu0 %v498
      %v864 = vpop.f32.mrb[0].mxu0
      %v865 = vadd.f32 %v720, %v864
      %v866 = vpop.f32.mrb[0].mxu0
      %v867 = vpop.f32.mrb[0].mxu0
      %v868 = vadd.f32 %v723, %v867
      %v869 = vpop.f32.mrb[0].mxu0
      %870 = vmatprep.mubr.bf16.mxu0 0
      %871 = vmatmul.mubr.bf16.gmra.mrb[0].mxu0 %v499
      %v872 = vpop.f32.mrb[0].mxu0
      %v873 = vadd.f32 %v728, %v872
      %v874 = vpop.f32.mrb[0].mxu0
      %v875 = vpop.f32.mrb[0].mxu0
      %v876 = vadd.f32 %v731, %v875
      %v877 = vpop.f32.mrb[0].mxu0
      %878 = vmatprep.mubr.bf16.mxu0 0
      %879 = vmatmul.mubr.bf16.gmra.mrb[0].mxu0 %v500
      %v880 = vpop.f32.mrb[0].mxu0
      %v881 = vadd.f32 %v736, %v880
      %v882 = vpop.f32.mrb[0].mxu0
      %v883 = vpop.f32.mrb[0].mxu0
      %v884 = vadd.f32 %v739, %v883
      %v885 = vpop.f32.mrb[0].mxu0
      %886 = vdwg.mxu0
      %v887 = vld [vmem:[%s6] sm:$0x1]
      %v889 = vlaneseq
      %v890 = vshrl.u32 %v889, 7
      %v891 = vsub.s32 0, %v890
      %v892 = vrot.slane %v887, %v891
      %v894 = vadd.f32 %v825, %v892
      %v895 = vadd.f32 %v828, %v892
      %v896 = vadd.f32 %v833, %v892
      %v897 = vadd.f32 %v836, %v892
      %v898 = vadd.f32 %v841, %v892
      %v899 = vadd.f32 %v844, %v892
      %v900 = vadd.f32 %v849, %v892
      %v901 = vadd.f32 %v852, %v892
      %v902 = vadd.f32 %v857, %v892
      %v903 = vadd.f32 %v860, %v892
      %v904 = vadd.f32 %v865, %v892
      %v905 = vadd.f32 %v868, %v892
      %v906 = vadd.f32 %v873, %v892
      %v907 = vadd.f32 %v876, %v892
      %v908 = vadd.f32 %v881, %v892
      %v909 = vadd.f32 %v884, %v892
      %v910 = vmax.f32 %v894, 0.0
      %v911 = vmax.f32 %v895, 0.0
      %v912 = vmax.f32 %v896, 0.0
      %v913 = vmax.f32 %v897, 0.0
      %v914 = vmax.f32 %v898, 0.0
      %v915 = vmax.f32 %v899, 0.0
      %v916 = vmax.f32 %v900, 0.0
      %v917 = vmax.f32 %v901, 0.0
      %v918 = vmax.f32 %v902, 0.0
      %v919 = vmax.f32 %v903, 0.0
      %v920 = vmax.f32 %v904, 0.0
      %v921 = vmax.f32 %v905, 0.0
      %v922 = vmax.f32 %v906, 0.0
      %v923 = vmax.f32 %v907, 0.0
      %v924 = vmax.f32 %v908, 0.0
      %v925 = vmax.f32 %v909, 0.0
      %v926 = vpack.c.bf16 %v911, %v910
      %v927 = vpack.c.bf16 %v913, %v912
      %v928 = vpack.c.bf16 %v915, %v914
      %v929 = vpack.c.bf16 %v917, %v916
      %v930 = vpack.c.bf16 %v919, %v918
      %v931 = vpack.c.bf16 %v921, %v920
      %v932 = vpack.c.bf16 %v923, %v922
      %v933 = vpack.c.bf16 %v925, %v924
      %v942 = vunpack.c.l.b16 %v926
      %v943 = vunpack.c.h.b16 %v926
      %v944 = vunpack.c.l.b16 %v927
      %v945 = vunpack.c.h.b16 %v927
      %v946 = vunpack.c.l.b16 %v928
      %v947 = vunpack.c.h.b16 %v928
      %v948 = vunpack.c.l.b16 %v929
      %v949 = vunpack.c.h.b16 %v929
      %v950 = vunpack.c.l.b16 %v930
      %v951 = vunpack.c.h.b16 %v930
      %v952 = vunpack.c.l.b16 %v931
      %v953 = vunpack.c.h.b16 %v931
      %v954 = vunpack.c.l.b16 %v932
      %v955 = vunpack.c.h.b16 %v932
      %v956 = vunpack.c.l.b16 %v933
      %v957 = vunpack.c.h.b16 %v933
      %v958 = vpack.c.b16 %v942, %v942
      %v959 = vpack.c.b16 %v943, %v943
      %v960 = vpack.c.b16 %v944, %v944
      %v961 = vpack.c.b16 %v945, %v945
      %v962 = vpack.c.b16 %v946, %v946
      %v963 = vpack.c.b16 %v947, %v947
      %v964 = vpack.c.b16 %v948, %v948
      %v965 = vpack.c.b16 %v949, %v949
      %v966 = vpack.c.b16 %v950, %v950
      %v967 = vpack.c.b16 %v951, %v951
      %v968 = vpack.c.b16 %v952, %v952
      %v969 = vpack.c.b16 %v953, %v953
      %v970 = vpack.c.b16 %v954, %v954
      %v971 = vpack.c.b16 %v955, %v955
      %v972 = vpack.c.b16 %v956, %v956
      %v973 = vpack.c.b16 %v957, %v957
      %990 = vst [vmem:[#allocation9] sm:$0xf] %v958
      %991 = vst [vmem:[#allocation9 + $0x4] sm:$0xf] %v959
      %992 = vst [vmem:[#allocation9 + $0x8] sm:$0xf] %v960
      %993 = vst [vmem:[#allocation9 + $0xc] sm:$0xf] %v961
      %994 = vst [vmem:[#allocation9 + $0x10] sm:$0xf] %v962
      %995 = vst [vmem:[#allocation9 + $0x14] sm:$0xf] %v963
      %996 = vst [vmem:[#allocation9 + $0x18] sm:$0xf] %v964
      %997 = vst [vmem:[#allocation9 + $0x1c] sm:$0xf] %v965
      %998 = vst [vmem:[#allocation9 + $0x20] sm:$0xf] %v966
      %999 = vst [vmem:[#allocation9 + $0x24] sm:$0xf] %v967
      %1000 = vst [vmem:[#allocation9 + $0x28] sm:$0xf] %v968
      %1001 = vst [vmem:[#allocation9 + $0x2c] sm:$0xf] %v969
      %1002 = vst [vmem:[#allocation9 + $0x30] sm:$0xf] %v970
      %1003 = vst [vmem:[#allocation9 + $0x34] sm:$0xf] %v971
      %1004 = vst [vmem:[#allocation9 + $0x38] sm:$0xf] %v972
      %1005 = vst [vmem:[#allocation9 + $0x3c] sm:$0xf] %v973
    $region49: #{tpu_custom_call.1} parent=1 // pred_fallthru
      _
    // Predicated region
    $region50: #{tpu_custom_call.1} parent=1 // pred_check
      _
    $region51: #{tpu_custom_call.1} parent=1 // pred_check_branch
      %1007 = sbr.rel (0) target = $region53
    $region52: #{tpu_custom_call.1} parent=1 // pred_region
      %s1009 = ssub.s32 1024, 1024
      %1010 = vsyncadd [#allocation5], %s1009
      %s1011 = sshll.u32 [#allocation9], 4
      %s1012 = int_to_ptr.vmem [resolvable:$true] %s1011
      %1017 = dma.vmem_to_hbm [thread:$0]  %s1012, 1024, %s7, [#allocation5], 64, 64, 4
    $region53: #{tpu_custom_call.1} parent=1 // pred_fallthru
      _
    // Predicated region
    $region54: #{tpu_custom_call.1} parent=1 // pred_check
      _
    $region55: #{tpu_custom_call.1} parent=1 // pred_check_branch
      %1019 = sbr.rel (0) target = $region57
    $region56: #{tpu_custom_call.1} parent=1 // pred_region
      %1020 = dma.done [#allocation5], 1024
    $region57: #{tpu_custom_call.1} parent=1 // pred_fallthru
      _
    %1021 = vsyncpa [#allocation4], 1
    %1022 = vsyncpa [#allocation7], 1
    %1023 = vsyncpa [#allocation5], 1

</llo_original>
